<compile_context>
chip_gen: v5e
topology: v5e:2x2
jax: 0.10.0
libtpu: 0.0.40
codegen_flags: <defaults>
</compile_context>

<pallas_src>
import jax
import jax.numpy as jnp
import numpy as np
from jax.experimental import pallas as pl


def _make_kernel(B, HW, Mp, Cp):
    inv_hw = float(1.0 / HW)

    def kernel(xc_ref, w_ref, patch_ref, avg_ref):
        # xc_ref:    (Mp, Kp) bf16 im2col patches + ones bias column (zero pad rows)
        # w_ref:     (Kp, Cp) bf16 conv weights + bias row (zero pad rows/cols)
        # patch_ref: (Mp, Cp) bf16 patch features (lane-dense, unmasked stores)
        # avg_ref:   (B,  Cp) f32  AvgPool2d(7,1,0) result per image
        feats = jnp.maximum(
            jnp.dot(xc_ref[...], w_ref[...], preferred_element_type=jnp.float32),
            0.0)                                    # fused conv+bias (MXU) + ReLU
        feats_bf16 = feats.astype(jnp.bfloat16)
        patch_ref[...] = feats_bf16

        # Block-diagonal pooling matrix built in-kernel (VPU iota + compares,
        # no integer divide): pool[b, m] = 1 iff b*HW <= m < (b+1)*HW.
        # Rows m >= B*HW (alignment padding) are automatically excluded.
        row_id = jax.lax.broadcasted_iota(jnp.int32, (B, Mp), 1)
        img_id = jax.lax.broadcasted_iota(jnp.int32, (B, Mp), 0)
        lo = img_id * HW
        pool = ((row_id >= lo) & (row_id < lo + HW)).astype(jnp.bfloat16)

        # bf16 x bf16 pooling dot on the MXU, f32 accumulation; exact-bf16 ones
        # in `pool`, f32 1/(H*W) scale applied afterwards for accuracy.
        avg_ref[...] = jnp.dot(pool, feats_bf16,
                               preferred_element_type=jnp.float32) * inv_hw

    return kernel


def visual_extractor_forward(images_nchw, w, b):
    """images_nchw: (B, C_in, H, W) f32 (PyTorch layout);
    w: (KH, KW, C_in, C_feat); b: (C_feat,)."""
    B, C_in, H, W = images_nchw.shape
    KH, KW, _, C_feat = w.shape
    ph, pw = KH // 2, KW // 2
    HW = H * W
    M = B * HW
    K = KH * KW * C_in
    Kb = K + 1                              # + folded-bias column
    Mp = pl.cdiv(M, 128) * 128              # aligned M: unmasked stores / clean MXU LHS
    Kp = pl.cdiv(Kb, 128) * 128             # aligned contraction dim
    Cp = pl.cdiv(C_feat, 128) * 128         # lane-dense outputs

    # ---- free XLA glue: layout, 'same' pad, im2col, bias fold, alignment pad ----
    x = jnp.transpose(images_nchw, (0, 2, 3, 1))                      # NCHW -> NHWC
    x = jnp.pad(x, ((0, 0), (ph, ph), (pw, pw), (0, 0)))
    # im2col: taps ordered (dy, dx), matching w.reshape(KH*KW*C_in, C_feat).
    cols = jnp.stack([x[:, dy:dy + H, dx:dx + W, :]
                      for dy in range(KH) for dx in range(KW)], axis=3)
    cols = cols.reshape(M, K)
    cols = jnp.concatenate([cols, jnp.ones((M, 1), cols.dtype)], axis=1)   # bias col
    cols = jnp.pad(cols, ((0, Mp - M), (0, Kp - Kb))).astype(jnp.bfloat16)  # (Mp, Kp)

    w_flat = jnp.concatenate([w.reshape(K, C_feat).astype(jnp.float32),
                              b.reshape(1, C_feat).astype(jnp.float32)], axis=0)
    w_pad = jnp.pad(w_flat, ((0, Kp - Kb), (0, Cp - C_feat))).astype(jnp.bfloat16)

    kernel = _make_kernel(B, HW, Mp, Cp)

    patch_pad, avg_pad = pl.pallas_call(
        kernel,
        # No grid: single fused step, whole (tiny, tile-aligned) arrays in VMEM.
        out_shape=(
            jax.ShapeDtypeStruct((Mp, Cp), jnp.bfloat16),
            jax.ShapeDtypeStruct((B, Cp), jnp.float32),
        ),
        cost_estimate=pl.CostEstimate(
            flops=2 * Mp * Kp * Cp + 2 * B * Mp * Cp,
            transcendentals=0,
            bytes_accessed=(Mp * Kp * 2 + Kp * Cp * 2
                            + Mp * Cp * 2 + B * Cp * 4)),
    )(cols, w_pad)

    # Slice the real rows/channels back out and restore the module's shapes:
    # torch: patch_feats.reshape(B, C, H*W).permute(0, 2, 1) -> (B, H*W, C)
    # torch: avg_fnt(patch_feats).squeeze().reshape(-1, C)   -> (B, C)
    patch_feats = patch_pad[:M, :C_feat].astype(jnp.float32).reshape(B, HW, C_feat)
    avg_feats = avg_pad[:, :C_feat]
    return patch_feats, avg_feats


def _reference(images_nchw, w, b):
    """Pure-JAX (f32) reference of the same synthetic forward pass."""
    out = jax.lax.conv_general_dilated(
        images_nchw, jnp.transpose(w, (3, 2, 0, 1)),
        window_strides=(1, 1), padding="SAME",
        dimension_numbers=("NCHW", "OIHW", "NCHW"))
    out = jnp.maximum(out + b[None, :, None, None], 0.0)       # (B, C, 7, 7)
    Bn, C, Hh, Ww = out.shape
    avg = jnp.mean(out, axis=(2, 3)).reshape(-1, C)            # AvgPool2d(7,1,0)
    patch = out.reshape(Bn, C, Hh * Ww).transpose(0, 2, 1)
    return patch, avg


if __name__ == "__main__":
    B, C_in, H, W = 2, 3, 7, 7          # 7x7 feature-map spatial, as in ResNet@224
    C_feat, KH, KW = 32, 3, 3

    key = jax.random.PRNGKey(0)
    k_img, k_w, k_b = jax.random.split(key, 3)
    images = jax.random.normal(k_img, (B, C_in, H, W), dtype=jnp.float32)
    w = jax.random.normal(k_w, (KH, KW, C_in, C_feat), dtype=jnp.float32) * 0.1
    b = jax.random.normal(k_b, (C_feat,), dtype=jnp.float32) * 0.1

    patch_feats, avg_feats = jax.block_until_ready(
        visual_extractor_forward(images, w, b))

    patch_ref, avg_ref = _reference(images, w, b)
    assert patch_feats.shape == (B, H * W, C_feat)
    assert avg_feats.shape == (B, C_feat)
    # bf16 MXU inputs / bf16 patch writeback vs f32 reference -> bf16 tolerance.
    np.testing.assert_allclose(np.asarray(patch_feats), np.asarray(patch_ref),
                               atol=2e-2, rtol=2e-2)
    np.testing.assert_allclose(np.asarray(avg_feats), np.asarray(avg_ref),
                               atol=2e-2, rtol=2e-2)
    print("KERNEL_OK")
</pallas_src>

<mosaic_0001>
module attributes {stable_mosaic.version = 11 : i64} {
  func.func @kernel(%arg0: memref<128x128xbf16, #tpu.memory_space<vmem>>, %arg1: memref<128x128xbf16, #tpu.memory_space<vmem>>, %arg2: memref<128x128xbf16, #tpu.memory_space<vmem>>, %arg3: memref<2x128xf32, #tpu.memory_space<vmem>>) attributes {dimension_semantics = [], scalar_prefetch = 0 : i64, scratch_operands = 0 : i64, tpu.core_type = #tpu.core_type<tc>} {
    %c0 = arith.constant 0 : index
    %c0_0 = arith.constant 0 : index
    %0 = vector.load %arg0[%c0, %c0_0] : memref<128x128xbf16, #tpu.memory_space<vmem>>, vector<128x128xbf16>
    %c0_1 = arith.constant 0 : index
    %c0_2 = arith.constant 0 : index
    %1 = vector.load %arg1[%c0_1, %c0_2] : memref<128x128xbf16, #tpu.memory_space<vmem>>, vector<128x128xbf16>
    %cst = arith.constant dense<0.000000e+00> : vector<128x128xf32>
    %2 = tpu.matmul %0, %1, %cst {dimension_numbers = #tpu.dot_dimension_numbers<[1], [0], [0], [1], [0, 0, 1, 1], [], []>} : vector<128x128xbf16>, vector<128x128xbf16>, vector<128x128xf32> -> vector<128x128xf32>
    %cst_3 = arith.constant 0.000000e+00 : f32
    %3 = vector.broadcast %cst_3 : f32 to vector<128x128xf32>
    %4 = arith.maximumf %2, %3 : vector<128x128xf32>
    %5 = arith.truncf %4 : vector<128x128xf32> to vector<128x128xbf16>
    %c0_4 = arith.constant 0 : index
    %c0_5 = arith.constant 0 : index
    %6 = vector.load %arg2[%c0_4, %c0_5] : memref<128x128xbf16, #tpu.memory_space<vmem>>, vector<128x128xbf16>
    tpu.vector_store %arg2[%c0_4, %c0_5], %5 {strides = array<i32>} : memref<128x128xbf16, #tpu.memory_space<vmem>>, vector<128x128xbf16>,
    %7 = tpu.iota {dimensions = array<i32: 1>} : vector<2x128xi32>
    %8 = tpu.iota {dimensions = array<i32: 0>} : vector<2x128xi32>
    %c49_i32 = arith.constant 49 : i32
    %9 = vector.broadcast %c49_i32 : i32 to vector<2x128xi32>
    %10 = arith.muli %8, %9 : vector<2x128xi32>
    %11 = arith.cmpi sge, %7, %10 : vector<2x128xi32>
    %c49_i32_6 = arith.constant 49 : i32
    %12 = vector.broadcast %c49_i32_6 : i32 to vector<2x128xi32>
    %13 = arith.addi %10, %12 : vector<2x128xi32>
    %14 = arith.cmpi slt, %7, %13 : vector<2x128xi32>
    %15 = arith.andi %11, %14 : vector<2x128xi1>
    %16 = arith.extui %15 : vector<2x128xi1> to vector<2x128xi32>
    %17 = arith.sitofp %16 : vector<2x128xi32> to vector<2x128xf32>
    %18 = arith.truncf %17 : vector<2x128xf32> to vector<2x128xbf16>
    %cst_7 = arith.constant dense<0.000000e+00> : vector<2x128xf32>
    %19 = tpu.matmul %18, %5, %cst_7 {dimension_numbers = #tpu.dot_dimension_numbers<[1], [0], [0], [1], [0, 0, 1, 1], [], []>} : vector<2x128xbf16>, vector<128x128xbf16>, vector<2x128xf32> -> vector<2x128xf32>
    %cst_8 = arith.constant 0.0204081628 : f32
    %20 = vector.broadcast %cst_8 : f32 to vector<2x128xf32>
    %21 = arith.mulf %19, %20 : vector<2x128xf32>
    %c0_9 = arith.constant 0 : index
    %c0_10 = arith.constant 0 : index
    %22 = vector.load %arg3[%c0_9, %c0_10] : memref<2x128xf32, #tpu.memory_space<vmem>>, vector<2x128xf32>
    tpu.vector_store %arg3[%c0_9, %c0_10], %21 {strides = array<i32>} : memref<2x128xf32, #tpu.memory_space<vmem>>, vector<2x128xf32>,
    return
  }
}

</mosaic_0001>

<llo_original>
// kernel: tpu_custom_call.1
$region0: #{tpu_custom_call.1}
  #allocation0 [shape = 'u32[]', space=smem, size = 0x4, offset = 0x4, fixed_abs, tag = 'smem constant byte address 0x4 - core index']
  #allocation1 [shape = 'u32[72,128]{1,0:T(1,128)}', space=vmem, size = 0x9000, scoped, tag = 'internal scratch']
  %s0 = inlined_call_operand.hbm [shape: bf16[128,128], index: 0, kind: input, shape index: {}]
  %s1 = inlined_call_operand.hbm [shape: bf16[128,128], index: 1, kind: input, shape index: {}]
  %s2 = inlined_call_operand.hbm [shape: bf16[128,128], index: 2, kind: output, shape index: {0}]
  %s3 = inlined_call_operand.hbm [shape: f32[2,128], index: 3, kind: output, shape index: {1}]
  %4 = xla_tuple %s2, %s3
  %s5 = sld [smem:[#allocation0]]
  $region34: #{tpu_custom_call.1} parent=0
    _
  %s7 = ssub.s32 1, %s5
  %s8 = scalar_select 0, %s7, %s5
  $region1: #{tpu_custom_call.1} parent=0
    #allocation2 [shape = 'u8[32768]{0}', space=vmem, size = 0x8000, scoped, tag = 'input window, operand 0, single buffered']
    #allocation3 [shape = 's32[1]{0}', space=sflag, size = 0x4, scoped, tag = 'scoped memory for tpu_custom_call.1']
    #allocation4 [shape = 's32[1]{0}', space=sflag, size = 0x4, scoped, tag = 'scoped memory for tpu_custom_call.1']
    #allocation5 [shape = 'u8[32768]{0}', space=vmem, size = 0x8000, scoped, tag = 'input window, operand 1, single buffered']
    #allocation6 [shape = 's32[1]{0}', space=sflag, size = 0x4, scoped, tag = 'scoped memory for tpu_custom_call.1']
    #allocation7 [shape = 'u8[32768]{0}', space=vmem, size = 0x8000, scoped, tag = 'output window, operand 0, single buffered']
    #allocation8 [shape = 'u8[1024]{0}', space=vmem, size = 0x400, scoped, tag = 'output window, operand 1, single buffered']
    #allocation9 [shape = 's32[1]{0}', space=sflag, size = 0x4, scoped, tag = 'scoped memory for tpu_custom_call.1']
    %9 = vsyncpa [#allocation3], 0
    %10 = vsyncpa [#allocation6], 0
    %11 = vsyncpa [#allocation4], 0
    %12 = vsyncpa [#allocation9], 0
    // Predicated region
    $region2: #{tpu_custom_call.1} parent=1 // pred_check
      _
    $region3: #{tpu_custom_call.1} parent=1 // pred_check_branch
      %14 = sbr.rel (0) target = $region5
    $region4: #{tpu_custom_call.1} parent=1 // pred_region
      %16 = vsyncadd [#allocation3], 0
      %s17 = sshll.u32 %s0, 4
      %s18 = int_to_ptr.hbm [resolvable:$true] %s17
      %s19 = sshll.u32 [#allocation2], 4
      %s20 = int_to_ptr.vmem [resolvable:$true] %s19
      %25 = dma.hbm_to_vmem [thread:$0]  %s18, 1024, %s20, [#allocation3], 64, 64, 4
    $region5: #{tpu_custom_call.1} parent=1 // pred_fallthru
      _
    // Predicated region
    $region6: #{tpu_custom_call.1} parent=1 // pred_check
      _
    $region7: #{tpu_custom_call.1} parent=1 // pred_check_branch
      %27 = sbr.rel (0) target = $region9
    $region8: #{tpu_custom_call.1} parent=1 // pred_region
      %29 = vsyncadd [#allocation6], 0
      %s30 = sshll.u32 %s1, 4
      %s31 = int_to_ptr.hbm [resolvable:$true] %s30
      %s32 = sshll.u32 [#allocation5], 4
      %s33 = int_to_ptr.vmem [resolvable:$true] %s32
      %38 = dma.hbm_to_vmem [thread:$0]  %s31, 1024, %s33, [#allocation6], 64, 64, 4
    $region9: #{tpu_custom_call.1} parent=1 // pred_fallthru
      _
    // Predicated region
    $region10: #{tpu_custom_call.1} parent=1 // pred_check
      _
    $region11: #{tpu_custom_call.1} parent=1 // pred_check_branch
      %40 = sbr.rel (0) target = $region13
    $region12: #{tpu_custom_call.1} parent=1 // pred_region
      %42 = dma.done [#allocation3], 1024
    $region13: #{tpu_custom_call.1} parent=1 // pred_fallthru
      _
    // Predicated region
    $region14: #{tpu_custom_call.1} parent=1 // pred_check
      _
    $region15: #{tpu_custom_call.1} parent=1 // pred_check_branch
      %44 = sbr.rel (0) target = $region17
    $region16: #{tpu_custom_call.1} parent=1 // pred_region
      %46 = dma.done [#allocation6], 1024
    $region17: #{tpu_custom_call.1} parent=1 // pred_fallthru
      _
    %v47 = vld [vmem:[#allocation2] sm:$0xf]
    %v48 = vld [vmem:[#allocation2 + $0x4] sm:$0xf]
    %v49 = vld [vmem:[#allocation2 + $0x8] sm:$0xf]
    %v50 = vld [vmem:[#allocation2 + $0xc] sm:$0xf]
    %v51 = vld [vmem:[#allocation2 + $0x10] sm:$0xf]
    %v52 = vld [vmem:[#allocation2 + $0x14] sm:$0xf]
    %v53 = vld [vmem:[#allocation2 + $0x18] sm:$0xf]
    %v54 = vld [vmem:[#allocation2 + $0x1c] sm:$0xf]
    %v55 = vld [vmem:[#allocation2 + $0x20] sm:$0xf]
    %v56 = vld [vmem:[#allocation2 + $0x24] sm:$0xf]
    %v57 = vld [vmem:[#allocation2 + $0x28] sm:$0xf]
    %v58 = vld [vmem:[#allocation2 + $0x2c] sm:$0xf]
    %v59 = vld [vmem:[#allocation2 + $0x30] sm:$0xf]
    %v60 = vld [vmem:[#allocation2 + $0x34] sm:$0xf]
    %v61 = vld [vmem:[#allocation2 + $0x38] sm:$0xf]
    %v62 = vld [vmem:[#allocation2 + $0x3c] sm:$0xf]
    %v63 = vld [vmem:[#allocation5] sm:$0xf]
    %v64 = vld [vmem:[#allocation5 + $0x4] sm:$0xf]
    %v65 = vld [vmem:[#allocation5 + $0x8] sm:$0xf]
    %v66 = vld [vmem:[#allocation5 + $0xc] sm:$0xf]
    %v67 = vld [vmem:[#allocation5 + $0x10] sm:$0xf]
    %v68 = vld [vmem:[#allocation5 + $0x14] sm:$0xf]
    %v69 = vld [vmem:[#allocation5 + $0x18] sm:$0xf]
    %v70 = vld [vmem:[#allocation5 + $0x1c] sm:$0xf]
    %v71 = vld [vmem:[#allocation5 + $0x20] sm:$0xf]
    %v72 = vld [vmem:[#allocation5 + $0x24] sm:$0xf]
    %v73 = vld [vmem:[#allocation5 + $0x28] sm:$0xf]
    %v74 = vld [vmem:[#allocation5 + $0x2c] sm:$0xf]
    %v75 = vld [vmem:[#allocation5 + $0x30] sm:$0xf]
    %v76 = vld [vmem:[#allocation5 + $0x34] sm:$0xf]
    %v77 = vld [vmem:[#allocation5 + $0x38] sm:$0xf]
    %v78 = vld [vmem:[#allocation5 + $0x3c] sm:$0xf]
    %v95 = vunpack.c.l.b16 %v47
    %v96 = vunpack.c.l.b16 %v48
    %v97 = vunpack.c.l.b16 %v49
    %v98 = vunpack.c.l.b16 %v50
    %v99 = vunpack.c.l.b16 %v51
    %v100 = vunpack.c.l.b16 %v52
    %v101 = vunpack.c.l.b16 %v53
    %v102 = vunpack.c.l.b16 %v54
    %v103 = vunpack.c.l.b16 %v55
    %v104 = vunpack.c.l.b16 %v56
    %v105 = vunpack.c.l.b16 %v57
    %v106 = vunpack.c.l.b16 %v58
    %v107 = vunpack.c.l.b16 %v59
    %v108 = vunpack.c.l.b16 %v60
    %v109 = vunpack.c.l.b16 %v61
    %v110 = vunpack.c.l.b16 %v62
    %v111 = vpack.c.b16 %v96, %v95
    %v112 = vpack.c.b16 %v98, %v97
    %v113 = vpack.c.b16 %v100, %v99
    %v114 = vpack.c.b16 %v102, %v101
    %v115 = vpack.c.b16 %v104, %v103
    %v116 = vpack.c.b16 %v106, %v105
    %v117 = vpack.c.b16 %v108, %v107
    %v118 = vpack.c.b16 %v110, %v109
    %v143 = vunpack.c.l.b16 %v63
    %v144 = vunpack.c.l.b16 %v64
    %v145 = vunpack.c.l.b16 %v65
    %v146 = vunpack.c.l.b16 %v66
    %v147 = vunpack.c.l.b16 %v67
    %v148 = vunpack.c.l.b16 %v68
    %v149 = vunpack.c.l.b16 %v69
    %v150 = vunpack.c.l.b16 %v70
    %v151 = vunpack.c.l.b16 %v71
    %v152 = vunpack.c.l.b16 %v72
    %v153 = vunpack.c.l.b16 %v73
    %v154 = vunpack.c.l.b16 %v74
    %v155 = vunpack.c.l.b16 %v75
    %v156 = vunpack.c.l.b16 %v76
    %v157 = vunpack.c.l.b16 %v77
    %v158 = vunpack.c.l.b16 %v78
    %v159 = vpack.c.b16 %v144, %v143
    %v160 = vpack.c.b16 %v146, %v145
    %v161 = vpack.c.b16 %v148, %v147
    %v162 = vpack.c.b16 %v150, %v149
    %v163 = vpack.c.b16 %v152, %v151
    %v164 = vpack.c.b16 %v154, %v153
    %v165 = vpack.c.b16 %v156, %v155
    %v166 = vpack.c.b16 %v158, %v157
    %175 = vmatpush.bf16.msra.mxu0 %v166
    %176 = vmatpush.bf16.msra.mxu0 %v165
    %177 = vmatpush.bf16.msra.mxu0 %v164
    %178 = vmatpush.bf16.msra.mxu0 %v163
    %179 = vmatpush.bf16.msra.mxu0 %v162
    %180 = vmatpush.bf16.msra.mxu0 %v161
    %181 = vmatpush.bf16.msra.mxu0 %v160
    %182 = vmatpush.bf16.msra.mxu0 %v159
    %183 = vmatmul.bf16.gmra.mxu0 %v111
    %v184 = vpop.f32.mrf.mxu0
    %v185 = vadd.f32 0.0, %v184
    %v186 = vpop.f32.mrf.mxu0
    %v187 = vadd.f32 0.0, %v186
    %188 = vmatmul.bf16.gmra.mxu0 %v112
    %v189 = vpop.f32.mrf.mxu0
    %v190 = vadd.f32 0.0, %v189
    %v191 = vpop.f32.mrf.mxu0
    %v192 = vadd.f32 0.0, %v191
    %193 = vmatmul.bf16.gmra.mxu0 %v113
    %v194 = vpop.f32.mrf.mxu0
    %v195 = vadd.f32 0.0, %v194
    %v196 = vpop.f32.mrf.mxu0
    %v197 = vadd.f32 0.0, %v196
    %198 = vmatmul.bf16.gmra.mxu0 %v114
    %v199 = vpop.f32.mrf.mxu0
    %v200 = vadd.f32 0.0, %v199
    %v201 = vpop.f32.mrf.mxu0
    %v202 = vadd.f32 0.0, %v201
    %203 = vmatmul.bf16.gmra.mxu0 %v115
    %v204 = vpop.f32.mrf.mxu0
    %v205 = vadd.f32 0.0, %v204
    %v206 = vpop.f32.mrf.mxu0
    %v207 = vadd.f32 0.0, %v206
    %208 = vmatmul.bf16.gmra.mxu0 %v116
    %v209 = vpop.f32.mrf.mxu0
    %v210 = vadd.f32 0.0, %v209
    %v211 = vpop.f32.mrf.mxu0
    %v212 = vadd.f32 0.0, %v211
    %213 = vmatmul.bf16.gmra.mxu0 %v117
    %v214 = vpop.f32.mrf.mxu0
    %v215 = vadd.f32 0.0, %v214
    %v216 = vpop.f32.mrf.mxu0
    %v217 = vadd.f32 0.0, %v216
    %218 = vmatmul.bf16.gmra.mxu0 %v118
    %v219 = vpop.f32.mrf.mxu0
    %v220 = vadd.f32 0.0, %v219
    %v221 = vpop.f32.mrf.mxu0
    %v222 = vadd.f32 0.0, %v221
    %223 = vdwg.mxu0
    %v224 = vmax.f32 %v185, 0.0
    %v225 = vmax.f32 %v187, 0.0
    %v226 = vmax.f32 %v190, 0.0
    %v227 = vmax.f32 %v192, 0.0
    %v228 = vmax.f32 %v195, 0.0
    %v229 = vmax.f32 %v197, 0.0
    %v230 = vmax.f32 %v200, 0.0
    %v231 = vmax.f32 %v202, 0.0
    %v232 = vmax.f32 %v205, 0.0
    %v233 = vmax.f32 %v207, 0.0
    %v234 = vmax.f32 %v210, 0.0
    %v235 = vmax.f32 %v212, 0.0
    %v236 = vmax.f32 %v215, 0.0
    %v237 = vmax.f32 %v217, 0.0
    %v238 = vmax.f32 %v220, 0.0
    %v239 = vmax.f32 %v222, 0.0
    %v240 = vpack.c.bf16 %v224, %v224
    %v241 = vpack.c.bf16 %v225, %v225
    %v242 = vpack.c.bf16 %v226, %v226
    %v243 = vpack.c.bf16 %v227, %v227
    %v244 = vpack.c.bf16 %v228, %v228
    %v245 = vpack.c.bf16 %v229, %v229
    %v246 = vpack.c.bf16 %v230, %v230
    %v247 = vpack.c.bf16 %v231, %v231
    %v248 = vpack.c.bf16 %v232, %v232
    %v249 = vpack.c.bf16 %v233, %v233
    %v250 = vpack.c.bf16 %v234, %v234
    %v251 = vpack.c.bf16 %v235, %v235
    %v252 = vpack.c.bf16 %v236, %v236
    %v253 = vpack.c.bf16 %v237, %v237
    %v254 = vpack.c.bf16 %v238, %v238
    %v255 = vpack.c.bf16 %v239, %v239
    %256 = vst [vmem:[#allocation7] sm:$0xf] %v240
    %257 = vst [vmem:[#allocation7 + $0x4] sm:$0xf] %v241
    %258 = vst [vmem:[#allocation7 + $0x8] sm:$0xf] %v242
    %259 = vst [vmem:[#allocation7 + $0xc] sm:$0xf] %v243
    %260 = vst [vmem:[#allocation7 + $0x10] sm:$0xf] %v244
    %261 = vst [vmem:[#allocation7 + $0x14] sm:$0xf] %v245
    %262 = vst [vmem:[#allocation7 + $0x18] sm:$0xf] %v246
    %263 = vst [vmem:[#allocation7 + $0x1c] sm:$0xf] %v247
    %264 = vst [vmem:[#allocation7 + $0x20] sm:$0xf] %v248
    %265 = vst [vmem:[#allocation7 + $0x24] sm:$0xf] %v249
    %266 = vst [vmem:[#allocation7 + $0x28] sm:$0xf] %v250
    %267 = vst [vmem:[#allocation7 + $0x2c] sm:$0xf] %v251
    %268 = vst [vmem:[#allocation7 + $0x30] sm:$0xf] %v252
    %269 = vst [vmem:[#allocation7 + $0x34] sm:$0xf] %v253
    %270 = vst [vmem:[#allocation7 + $0x38] sm:$0xf] %v254
    %271 = vst [vmem:[#allocation7 + $0x3c] sm:$0xf] %v255
    %v272 = vlaneseq
    %v273 = vand.u32 %v272, 127
    %v274 = vlaneseq
    %v275 = vshrl.u32 %v274, 7
    %v276 = vmul.u32 %v275, 49
    %vm277 = vcmp.ge.s32.totalorder %v273, %v276
    %v278 = vadd.s32 %v276, 49
    %vm279 = vcmp.lt.s32.totalorder %v273, %v278
    %vm280 = vmand %vm277, %vm279
    %v281 = vsel %vm280, 1, 0
    %v282 = vcvt.s32.f32 %v281
    %v283 = vpack.c.bf16 %v282, %v282
    %v300 = vunpack.c.l.b16 %v240
    %v301 = vunpack.c.l.b16 %v241
    %v302 = vunpack.c.l.b16 %v242
    %v303 = vunpack.c.l.b16 %v243
    %v304 = vunpack.c.l.b16 %v244
    %v305 = vunpack.c.l.b16 %v245
    %v306 = vunpack.c.l.b16 %v246
    %v307 = vunpack.c.l.b16 %v247
    %v308 = vunpack.c.l.b16 %v248
    %v309 = vunpack.c.l.b16 %v249
    %v310 = vunpack.c.l.b16 %v250
    %v311 = vunpack.c.l.b16 %v251
    %v312 = vunpack.c.l.b16 %v252
    %v313 = vunpack.c.l.b16 %v253
    %v314 = vunpack.c.l.b16 %v254
    %v315 = vunpack.c.l.b16 %v255
    %v316 = vpack.c.b16 %v301, %v300
    %v317 = vpack.c.b16 %v303, %v302
    %v318 = vpack.c.b16 %v305, %v304
    %v319 = vpack.c.b16 %v307, %v306
    %v320 = vpack.c.b16 %v309, %v308
    %v321 = vpack.c.b16 %v311, %v310
    %v322 = vpack.c.b16 %v313, %v312
    %v323 = vpack.c.b16 %v315, %v314
    %332 = vmatpush.bf16.msra.mxu0 %v323
    %333 = vmatpush.bf16.msra.mxu0 %v322
    %334 = vmatpush.bf16.msra.mxu0 %v321
    %335 = vmatpush.bf16.msra.mxu0 %v320
    %336 = vmatpush.bf16.msra.mxu0 %v319
    %337 = vmatpush.bf16.msra.mxu0 %v318
    %338 = vmatpush.bf16.msra.mxu0 %v317
    %339 = vmatpush.bf16.msra.mxu0 %v316
    %340 = vmatmul.bf16.gmra.mxu0 %v283
    %v341 = vpop.f32.mrf.mxu0
    %v342 = vadd.f32 0.0, %v341
    %v343 = vpop.f32.mrf.mxu0
    %344 = vdwg.mxu0
    %v345 = vmul.f32 %v342, 0.020408163
    %346 = vst [vmem:[#allocation8] sm:$0x3] %v345
    // Predicated region
    $region18: #{tpu_custom_call.1} parent=1 // pred_check
      _
    $region19: #{tpu_custom_call.1} parent=1 // pred_check_branch
      %348 = sbr.rel (0) target = $region21
    $region20: #{tpu_custom_call.1} parent=1 // pred_region
      %350 = vsyncadd [#allocation4], 0
      %s351 = sshll.u32 [#allocation7], 4
      %s352 = int_to_ptr.vmem [resolvable:$true] %s351
      %s353 = sshll.u32 %s2, 4
      %s354 = int_to_ptr.hbm [resolvable:$true] %s353
      %359 = dma.vmem_to_hbm [thread:$0]  %s352, 1024, %s354, [#allocation4], 64, 64, 4
    $region21: #{tpu_custom_call.1} parent=1 // pred_fallthru
      _
    // Predicated region
    $region22: #{tpu_custom_call.1} parent=1 // pred_check
      _
    $region23: #{tpu_custom_call.1} parent=1 // pred_check_branch
      %361 = sbr.rel (0) target = $region25
    $region24: #{tpu_custom_call.1} parent=1 // pred_region
      %363 = vsyncadd [#allocation9], 0
      %s365 = sshll.u32 [#allocation8], 4
      %s366 = int_to_ptr.vmem [resolvable:$true] %s365
      %s367 = sshll.u32 %s3, 4
      %s368 = int_to_ptr.hbm [resolvable:$true] %s367
      %370 = dma.vmem_to_hbm [thread:$0]  %s366, 32, %s368, [#allocation9]
    $region25: #{tpu_custom_call.1} parent=1 // pred_fallthru
      _
    // Predicated region
    $region26: #{tpu_custom_call.1} parent=1 // pred_check
      _
    $region27: #{tpu_custom_call.1} parent=1 // pred_check_branch
      %372 = sbr.rel (0) target = $region29
    $region28: #{tpu_custom_call.1} parent=1 // pred_region
      %374 = dma.done [#allocation4], 1024
    $region29: #{tpu_custom_call.1} parent=1 // pred_fallthru
      _
    // Predicated region
    $region30: #{tpu_custom_call.1} parent=1 // pred_check
      _
    $region31: #{tpu_custom_call.1} parent=1 // pred_check_branch
      %376 = sbr.rel (0) target = $region33
    $region32: #{tpu_custom_call.1} parent=1 // pred_region
      %378 = dma.done [#allocation9], 32
    $region33: #{tpu_custom_call.1} parent=1 // pred_fallthru
      _
    %379 = vsyncpa [#allocation3], 1
    %380 = vsyncpa [#allocation6], 1
    %381 = vsyncpa [#allocation4], 1
    %382 = vsyncpa [#allocation9], 1

</llo_original>
